<compile_context>
chip_gen: v6e
topology: v6e:2x2x1
jax: 0.10.0
libtpu: 0.0.40
codegen_flags: <defaults>
</compile_context>

<pallas_src>
import jax
import jax.numpy as jnp
from jax.experimental import pallas as pl
from jax.experimental.pallas import tpu as pltpu

# Problem constants from the module
K = 5
M_UE = 8
N_BS = 5
ACT_DIM = K + M_UE + M_UE          # 21
OBS_DIM = 4 * M_UE + K             # 37 (tasks, d, rho, tau, beta concat)
HIDDEN = 128

SUBLANE = 8


def _round_up(n, m):
    return ((n + m - 1) // m) * m


def _choose_batch_tile(B, block_b, min_split=512):
    """Pick (batch_tile, padded_batch).

    Small batches run as a single grid step (tile == padded batch).  Batches
    large enough to be worth splitting get an even number (>=2) of equal tiles
    so v7x's two TensorCores split the 'parallel' axis evenly; harmless on
    single-TC v5e/v6e.
    """
    b8 = _round_up(max(B, 1), SUBLANE)
    if b8 <= min_split and b8 <= block_b:
        return b8, b8
    n_tiles = max(2, pl.cdiv(b8, block_b))
    if n_tiles % 2:
        n_tiles += 1
    tb = _round_up(pl.cdiv(b8, n_tiles), SUBLANE)
    return tb, tb * n_tiles


# ---------------------------------------------------------------------------
# Kernels
# ---------------------------------------------------------------------------

def actor_kernel(x_ref, w1_ref, b1_ref, w2_ref, b2_ref, o_ref):
    """One (agent, batch-tile) step: tanh(relu(x@w1 + b1) @ w2 + b2)."""
    x = x_ref[...].astype(w1_ref.dtype)                       # f32 -> bf16 (VPU)
    h = jnp.dot(x, w1_ref[...], preferred_element_type=jnp.float32)
    h = jnp.maximum(h + b1_ref[...], 0.0)                     # (TB,128)+(1,128)
    y = jnp.dot(h.astype(w2_ref.dtype), w2_ref[...],
                preferred_element_type=jnp.float32)
    o_ref[...] = jnp.tanh(y + b2_ref[...]).astype(o_ref.dtype)


def actors_fused_kernel(x_ref, w1_ref, b1_ref, w2_ref, b2_ref, o_ref):
    """All N agents resident in VMEM, single grid step, static agent loop.

    Used for the tiny-inference case (one batch tile per agent) where per-grid
    step overhead would otherwise dominate.
    """
    n_agents = x_ref.shape[0]                 # static (shape known at trace time)
    for a in range(n_agents):
        x = x_ref[a].astype(w1_ref.dtype)
        h = jnp.dot(x, w1_ref[a], preferred_element_type=jnp.float32)
        h = jnp.maximum(h + b1_ref[a], 0.0)
        y = jnp.dot(h.astype(w2_ref.dtype), w2_ref[a],
                    preferred_element_type=jnp.float32)
        o_ref[a] = jnp.tanh(y + b2_ref[a]).astype(o_ref.dtype)


# ---------------------------------------------------------------------------
# One-time parameter prep (hoisted out of the per-call wrappers)
# ---------------------------------------------------------------------------

def prepare_actor_params(w1, b1, w2, b2):
    """Cast weights to bf16 for the MXU, keep biases f32 and add a broadcast row
    axis.  Works for single-actor ((obs,H) etc.) and stacked ((N,obs,H) etc.)."""
    return (w1.astype(jnp.bfloat16),
            b1.astype(jnp.float32)[..., None, :],
            w2.astype(jnp.bfloat16),
            b2.astype(jnp.float32)[..., None, :])


# ---------------------------------------------------------------------------
# Wrappers
# ---------------------------------------------------------------------------

def actor_forward(x, params, *, block_b=1024):
    """Single actor. x: (B, obs_dim) f32, params from prepare_actor_params.
    Returns (B, act_dim) f32."""
    w1, b1, w2, b2 = params
    B, obs = x.shape
    hidden = w1.shape[-1]
    act = w2.shape[-1]

    tb, b_p = _choose_batch_tile(B, block_b)
    x_p = jnp.pad(x, ((0, b_p - B), (0, 0))) if b_p != B else x

    out = pl.pallas_call(
        actor_kernel,
        out_shape=jax.ShapeDtypeStruct((b_p, act), jnp.float32),
        grid=(b_p // tb,),
        in_specs=[
            pl.BlockSpec((tb, obs), lambda i: (i, 0)),           # x tile
            pl.BlockSpec((obs, hidden), lambda i: (0, 0)),       # w1 resident
            pl.BlockSpec((1, hidden), lambda i: (0, 0)),         # b1 resident
            pl.BlockSpec((hidden, act), lambda i: (0, 0)),       # w2 resident
            pl.BlockSpec((1, act), lambda i: (0, 0)),            # b2 resident
        ],
        out_specs=pl.BlockSpec((tb, act), lambda i: (i, 0)),
        compiler_params=pltpu.CompilerParams(
            dimension_semantics=("parallel",)),
    )(x_p, w1, b1, w2, b2)
    return out[:B] if b_p != B else out


def actors_forward(x, params, *, block_b=1024):
    """Fused multi-agent forward (one pallas_call for all N actors).

    x: (N, B, obs_dim) f32; params from prepare_actor_params on stacked weights:
      w1 (N, obs, 128) bf16, b1 (N, 1, 128) f32, w2 (N, 128, act) bf16,
      b2 (N, 1, act) f32.  Returns (N, B, act_dim) f32.
    """
    w1, b1, w2, b2 = params
    N, B, obs = x.shape
    hidden = w1.shape[-1]
    act = w2.shape[-1]

    tb, b_p = _choose_batch_tile(B, block_b)
    n_tiles = b_p // tb
    x_p = jnp.pad(x, ((0, 0), (0, b_p - B), (0, 0))) if b_p != B else x

    if n_tiles == 1:
        # Tiny inference: one grid step, all agents' weights resident (~tens of
        # KB), static agent loop in-kernel -> no per-agent step overhead.
        out = pl.pallas_call(
            actors_fused_kernel,
            out_shape=jax.ShapeDtypeStruct((N, b_p, act), jnp.float32),
            grid=(1,),
            in_specs=[
                pl.BlockSpec((N, b_p, obs), lambda i: (0, 0, 0)),
                pl.BlockSpec((N, obs, hidden), lambda i: (0, 0, 0)),
                pl.BlockSpec((N, 1, hidden), lambda i: (0, 0, 0)),
                pl.BlockSpec((N, hidden, act), lambda i: (0, 0, 0)),
                pl.BlockSpec((N, 1, act), lambda i: (0, 0, 0)),
            ],
            out_specs=pl.BlockSpec((N, b_p, act), lambda i: (0, 0, 0)),
        )(x_p, w1, b1, w2, b2)
    else:
        # Large batch: agent-outer / batch-inner grid, weights resident per
        # agent, both axes parallel (megacore-shardable on v7x).
        out = pl.pallas_call(
            actor_kernel,
            out_shape=jax.ShapeDtypeStruct((N, b_p, act), jnp.float32),
            grid=(N, n_tiles),
            in_specs=[
                pl.BlockSpec((None, tb, obs), lambda a, i: (a, i, 0)),
                pl.BlockSpec((None, obs, hidden), lambda a, i: (a, 0, 0)),
                pl.BlockSpec((None, 1, hidden), lambda a, i: (a, 0, 0)),
                pl.BlockSpec((None, hidden, act), lambda a, i: (a, 0, 0)),
                pl.BlockSpec((None, 1, act), lambda a, i: (a, 0, 0)),
            ],
            out_specs=pl.BlockSpec((None, tb, act), lambda a, i: (a, i, 0)),
            compiler_params=pltpu.CompilerParams(
                dimension_semantics=("parallel", "parallel")),
        )(x_p, w1, b1, w2, b2)
    return out[:, :B, :] if b_p != B else out


# ---------------------------------------------------------------------------
# Init (PyTorch-style uniform, f32 master params)
# ---------------------------------------------------------------------------

def init_actor_params(key, obs_dim=OBS_DIM, act_dim=ACT_DIM, hidden=HIDDEN):
    k1, k2, k3, k4 = jax.random.split(key, 4)
    bound1 = 1.0 / jnp.sqrt(obs_dim)
    bound2 = 1.0 / jnp.sqrt(hidden)
    w1 = jax.random.uniform(k1, (obs_dim, hidden), jnp.float32, -bound1, bound1)
    b1 = jax.random.uniform(k2, (hidden,), jnp.float32, -bound1, bound1)
    w2 = jax.random.uniform(k3, (hidden, act_dim), jnp.float32, -bound2, bound2)
    b2 = jax.random.uniform(k4, (act_dim,), jnp.float32, -bound2, bound2)
    return w1, b1, w2, b2


if __name__ == "__main__":
    key = jax.random.PRNGKey(0)
    k_params, k_x, k_multi, k_big = jax.random.split(key, 4)

    # bf16 MXU operands -> relaxed tolerance vs the f32 reference.
    ATOL = 2e-2

    # ---- single-actor path: one batch of observations through one Actor ----
    batch = 5
    x = jax.random.uniform(k_x, (batch, OBS_DIM), jnp.float32, 0.0, 1.0)
    w1, b1, w2, b2 = init_actor_params(k_params)
    params = prepare_actor_params(w1, b1, w2, b2)   # hoisted one-time prep

    out = jax.block_until_ready(actor_forward(x, params))
    ref = jnp.tanh(jnp.maximum(x @ w1 + b1, 0.0) @ w2 + b2)
    assert out.shape == (batch, ACT_DIM)
    assert jnp.allclose(out, ref, atol=ATOL, rtol=ATOL)

    # ---- single-actor, multi-tile grid path (exercise the tiled branch) ----
    big_batch = 24
    xb = jax.random.uniform(k_big, (big_batch, OBS_DIM), jnp.float32, 0.0, 1.0)
    out_b = jax.block_until_ready(actor_forward(xb, params, block_b=8))
    ref_b = jnp.tanh(jnp.maximum(xb @ w1 + b1, 0.0) @ w2 + b2)
    assert out_b.shape == (big_batch, ACT_DIM)
    assert jnp.allclose(out_b, ref_b, atol=ATOL, rtol=ATOL)

    # ---- fused multi-agent path: all N_BS actors in one single-step call ----
    n_agents, per_agent_batch = N_BS, 4
    keys = jax.random.split(k_multi, n_agents + 1)
    xs = jax.random.uniform(keys[0], (n_agents, per_agent_batch, OBS_DIM),
                            jnp.float32, 0.0, 1.0)
    plist = [init_actor_params(keys[i + 1]) for i in range(n_agents)]
    w1s = jnp.stack([p[0] for p in plist])
    b1s = jnp.stack([p[1] for p in plist])
    w2s = jnp.stack([p[2] for p in plist])
    b2s = jnp.stack([p[3] for p in plist])
    mparams = prepare_actor_params(w1s, b1s, w2s, b2s)

    out_multi = jax.block_until_ready(actors_forward(xs, mparams))
    h_ref = jnp.maximum(
        jnp.einsum("nbo,noh->nbh", xs, w1s) + b1s[:, None, :], 0.0)
    ref_multi = jnp.tanh(
        jnp.einsum("nbh,nha->nba", h_ref, w2s) + b2s[:, None, :])
    assert out_multi.shape == (n_agents, per_agent_batch, ACT_DIM)
    assert jnp.allclose(out_multi, ref_multi, atol=ATOL, rtol=ATOL)

    print("KERNEL_OK")
</pallas_src>

<mosaic_0001>
module attributes {stable_mosaic.version = 11 : i64} {
  func.func @actor_kernel(%arg0: i32, %arg1: memref<8x37xf32, #tpu.memory_space<vmem>>, %arg2: memref<37x128xbf16, #tpu.memory_space<vmem>>, %arg3: memref<1x128xf32, #tpu.memory_space<vmem>>, %arg4: memref<128x21xbf16, #tpu.memory_space<vmem>>, %arg5: memref<1x21xf32, #tpu.memory_space<vmem>>, %arg6: memref<8x21xf32, #tpu.memory_space<vmem>>) attributes {dimension_semantics = [#tpu.dimension_semantics<parallel>], iteration_bounds = array<i64: 1>, scalar_prefetch = 0 : i64, scratch_operands = 0 : i64, tpu.core_type = #tpu.core_type<tc>, window_params = [{transform_indices = @transform_0, window_bounds = array<i64: 8, 37>}, {pipeline_mode = #tpu.pipeline_mode<synchronous>, transform_indices = @transform_1, window_bounds = array<i64: 37, 128>}, {pipeline_mode = #tpu.pipeline_mode<synchronous>, transform_indices = @transform_2, window_bounds = array<i64: 1, 128>}, {pipeline_mode = #tpu.pipeline_mode<synchronous>, transform_indices = @transform_3, window_bounds = array<i64: 128, 21>}, {pipeline_mode = #tpu.pipeline_mode<synchronous>, transform_indices = @transform_4, window_bounds = array<i64: 1, 21>}, {transform_indices = @transform_5, window_bounds = array<i64: 8, 21>}]} {
    %c0 = arith.constant 0 : index
    %c0_0 = arith.constant 0 : index
    %0 = vector.load %arg1[%c0, %c0_0] : memref<8x37xf32, #tpu.memory_space<vmem>>, vector<8x37xf32>
    %1 = arith.truncf %0 : vector<8x37xf32> to vector<8x37xbf16>
    %c0_1 = arith.constant 0 : index
    %c0_2 = arith.constant 0 : index
    %2 = vector.load %arg2[%c0_1, %c0_2] : memref<37x128xbf16, #tpu.memory_space<vmem>>, vector<37x128xbf16>
    %cst = arith.constant dense<0.000000e+00> : vector<8x128xf32>
    %3 = tpu.matmul %1, %2, %cst {dimension_numbers = #tpu.dot_dimension_numbers<[1], [0], [0], [1], [0, 0, 1, 1], [], []>} : vector<8x37xbf16>, vector<37x128xbf16>, vector<8x128xf32> -> vector<8x128xf32>
    %c0_3 = arith.constant 0 : index
    %c0_4 = arith.constant 0 : index
    %4 = vector.load %arg3[%c0_3, %c0_4] : memref<1x128xf32, #tpu.memory_space<vmem>>, vector<1x128xf32>
    %5 = vector.broadcast %4 : vector<1x128xf32> to vector<8x128xf32>
    %6 = arith.addf %3, %5 : vector<8x128xf32>
    %cst_5 = arith.constant 0.000000e+00 : f32
    %7 = vector.broadcast %cst_5 : f32 to vector<8x128xf32>
    %8 = arith.maximumf %6, %7 : vector<8x128xf32>
    %9 = arith.truncf %8 : vector<8x128xf32> to vector<8x128xbf16>
    %c0_6 = arith.constant 0 : index
    %c0_7 = arith.constant 0 : index
    %10 = vector.load %arg4[%c0_6, %c0_7] : memref<128x21xbf16, #tpu.memory_space<vmem>>, vector<128x21xbf16>
    %cst_8 = arith.constant dense<0.000000e+00> : vector<8x21xf32>
    %11 = tpu.matmul %9, %10, %cst_8 {dimension_numbers = #tpu.dot_dimension_numbers<[1], [0], [0], [1], [0, 0, 1, 1], [], []>} : vector<8x128xbf16>, vector<128x21xbf16>, vector<8x21xf32> -> vector<8x21xf32>
    %c0_9 = arith.constant 0 : index
    %c0_10 = arith.constant 0 : index
    %12 = vector.load %arg5[%c0_9, %c0_10] : memref<1x21xf32, #tpu.memory_space<vmem>>, vector<1x21xf32>
    %13 = vector.broadcast %12 : vector<1x21xf32> to vector<8x21xf32>
    %14 = arith.addf %11, %13 : vector<8x21xf32>
    %15 = math.tanh %14 : vector<8x21xf32>
    %c0_11 = arith.constant 0 : index
    %c0_12 = arith.constant 0 : index
    %16 = vector.load %arg6[%c0_11, %c0_12] : memref<8x21xf32, #tpu.memory_space<vmem>>, vector<8x21xf32>
    tpu.vector_store %arg6[%c0_11, %c0_12], %15 {strides = array<i32>} : memref<8x21xf32, #tpu.memory_space<vmem>>, vector<8x21xf32>,
    return
  }
  func.func @transform_0(%arg0: i32) -> (i32, i32) {
    %c0_i32 = arith.constant 0 : i32
    %c0_i32_0 = arith.constant 0 : i32
    return %arg0, %c0_i32 : i32, i32
  }
  func.func @transform_1(%arg0: i32) -> (i32, i32) {
    %c0_i32 = arith.constant 0 : i32
    %c0_i32_0 = arith.constant 0 : i32
    %c0_i32_1 = arith.constant 0 : i32
    return %c0_i32, %c0_i32_0 : i32, i32
  }
  func.func @transform_2(%arg0: i32) -> (i32, i32) {
    %c0_i32 = arith.constant 0 : i32
    %c0_i32_0 = arith.constant 0 : i32
    %c0_i32_1 = arith.constant 0 : i32
    return %c0_i32, %c0_i32_0 : i32, i32
  }
  func.func @transform_3(%arg0: i32) -> (i32, i32) {
    %c0_i32 = arith.constant 0 : i32
    %c0_i32_0 = arith.constant 0 : i32
    %c0_i32_1 = arith.constant 0 : i32
    return %c0_i32, %c0_i32_0 : i32, i32
  }
  func.func @transform_4(%arg0: i32) -> (i32, i32) {
    %c0_i32 = arith.constant 0 : i32
    %c0_i32_0 = arith.constant 0 : i32
    %c0_i32_1 = arith.constant 0 : i32
    return %c0_i32, %c0_i32_0 : i32, i32
  }
  func.func @transform_5(%arg0: i32) -> (i32, i32) {
    %c0_i32 = arith.constant 0 : i32
    %c0_i32_0 = arith.constant 0 : i32
    return %arg0, %c0_i32 : i32, i32
  }
}

</mosaic_0001>

<llo_original>
// kernel: tpu_custom_call.1
$region0: #{tpu_custom_call.1}
  #allocation0 [shape = 'u32[]', space=smem, size = 0x4, offset = 0x4, fixed_abs, tag = 'smem constant byte address 0x4 - core index']
  #allocation1 [shape = 'u32[144,128]{1,0:T(1,128)}', space=vmem, size = 0x12000, scoped, tag = 'internal scratch']
  %s0 = inlined_call_operand.vmem [shape: f32[8,37], index: 0, kind: input, shape index: {}]
  %s1 = inlined_call_operand.vmem [shape: bf16[37,128], index: 1, kind: input, shape index: {}]
  %s2 = inlined_call_operand.vmem [shape: f32[1,128], index: 2, kind: input, shape index: {}]
  %s3 = inlined_call_operand.vmem [shape: bf16[128,21], index: 3, kind: input, shape index: {}]
  %s4 = inlined_call_operand.vmem [shape: f32[1,21], index: 4, kind: input, shape index: {}]
  %s5 = inlined_call_operand.hbm [shape: f32[8,21], index: 5, kind: output, shape index: {}]
  %s6 = sld [smem:[#allocation0]]
  $region30: #{tpu_custom_call.1} parent=0
    _
  %s8 = ssub.s32 1, %s6
  %s9 = scalar_select 0, %s8, %s6
  $region1: #{tpu_custom_call.1} parent=0
    #allocation2 [shape = 'u8[4096]{0}', space=vmem, size = 0x1000, scoped, tag = 'output window, operand 0, single buffered']
    #allocation3 [shape = 's32[1]{0}', space=sflag, size = 0x4, scoped, tag = 'scoped memory for tpu_custom_call.1']
    %10 = vsyncpa [#allocation3], 0
    // Predicated region
    $region2: #{tpu_custom_call.1} parent=1 // pred_check
      _
    $region3: #{tpu_custom_call.1} parent=1 // pred_check_branch
      %12 = sbr.rel (0) target = $region5
    $region4: #{tpu_custom_call.1} parent=1 // pred_region
      _
    $region5: #{tpu_custom_call.1} parent=1 // pred_fallthru
      _
    // Predicated region
    $region6: #{tpu_custom_call.1} parent=1 // pred_check
      _
    $region7: #{tpu_custom_call.1} parent=1 // pred_check_branch
      %14 = sbr.rel (0) target = $region9
    $region8: #{tpu_custom_call.1} parent=1 // pred_region
      _
    $region9: #{tpu_custom_call.1} parent=1 // pred_fallthru
      _
    // Predicated region
    $region10: #{tpu_custom_call.1} parent=1 // pred_check
      _
    $region11: #{tpu_custom_call.1} parent=1 // pred_check_branch
      %16 = sbr.rel (0) target = $region13
    $region12: #{tpu_custom_call.1} parent=1 // pred_region
      _
    $region13: #{tpu_custom_call.1} parent=1 // pred_fallthru
      _
    // Predicated region
    $region14: #{tpu_custom_call.1} parent=1 // pred_check
      _
    $region15: #{tpu_custom_call.1} parent=1 // pred_check_branch
      %18 = sbr.rel (0) target = $region17
    $region16: #{tpu_custom_call.1} parent=1 // pred_region
      _
    $region17: #{tpu_custom_call.1} parent=1 // pred_fallthru
      _
    // Predicated region
    $region18: #{tpu_custom_call.1} parent=1 // pred_check
      _
    $region19: #{tpu_custom_call.1} parent=1 // pred_check_branch
      %20 = sbr.rel (0) target = $region21
    $region20: #{tpu_custom_call.1} parent=1 // pred_region
      _
    $region21: #{tpu_custom_call.1} parent=1 // pred_fallthru
      _
    %v22 = vld [vmem:[%s0] sm:$0xff]
    %v23 = vpack.c.bf16 %v22, %v22
    %v24 = vld [vmem:[%s1] sm:$0xf]
    %v25 = vld [vmem:[%s1 + $0x4] sm:$0xf]
    %v26 = vld [vmem:[%s1 + $0x8] sm:$0xf]
    %v27 = vld [vmem:[%s1 + $0xc] sm:$0xf]
    %v28 = vld [vmem:[%s1 + $0x10] sm:$0x7]
    %v29 = vld [vmem:[%s2] sm:$0x1]
    %v31 = vlaneseq
    %v32 = vshrl.u32 %v31, 7
    %v33 = vsub.s32 0, %v32
    %v34 = vrot.slane %v29, %v33
    %v41 = vunpack.c.l.b16 %v24
    %v42 = vunpack.c.l.b16 %v25
    %v43 = vunpack.c.l.b16 %v26
    %v44 = vunpack.c.l.b16 %v27
    %v45 = vunpack.c.l.b16 %v28
    %v46 = vpack.c.b16 %v42, %v41
    %v47 = vpack.c.b16 %v44, %v43
    %v48 = vpack.c.b16 %v45, %v45
    %vm51 = vcmask 302080
    %v53 = vsel %vm51, %v23, 0
    %vm55 = vcmask 1041408
    %vm56 = vcmask 1042432
    %v57 = vsel %vm55, 4294967295, 65535
    %v58 = vsel %vm56, %v57, 0
    %v60 = vand.u32 %v48, %v58
    %62 = vmatprep.subr.bf16.mxu0 0
    %63 = vmatpush1.bf16.msra.mxu0 0
    %64 = vmatprep.subr.bf16.mxu0 0
    %65 = vmatpush1.bf16.msra.mxu0 0
    %66 = vmatprep.subr.bf16.mxu0 0
    %67 = vmatpush1.bf16.msra.mxu0 0
    %68 = vmatprep.subr.bf16.mxu0 0
    %69 = vmatpush1.bf16.msra.mxu0 0
    %70 = vmatprep.subr.bf16.mxu0 0
    %71 = vmatpush1.bf16.msra.mxu0 0
    %72 = vmatprep.subr.bf16.mxu0 0
    %73 = vmatpush1.bf16.msra.mxu0 %v60
    %74 = vmatprep.subr.bf16.mxu0 0
    %75 = vmatpush1.bf16.msra.mxu0 %v47
    %76 = vmatprep.subr.bf16.mxu0 0
    %77 = vmatpush1.bf16.msra.mxu0 %v46
    %78 = vmatprep.subr.bf16.mxu0 0
    %79 = vmatpush2.bf16.msra.mxu0 0
    %80 = vmatprep.subr.bf16.mxu0 0
    %81 = vmatpush2.bf16.msra.mxu0 0
    %82 = vmatprep.subr.bf16.mxu0 0
    %83 = vmatpush2.bf16.msra.mxu0 0
    %84 = vmatprep.subr.bf16.mxu0 0
    %85 = vmatpush2.bf16.msra.mxu0 0
    %86 = vmatprep.subr.bf16.mxu0 0
    %87 = vmatpush2.bf16.msra.mxu0 0
    %88 = vmatprep.subr.bf16.mxu0 0
    %89 = vmatpush2.bf16.msra.mxu0 0
    %90 = vmatprep.subr.bf16.mxu0 0
    %91 = vmatpush2.bf16.msra.mxu0 0
    %92 = vmatprep.subr.bf16.mxu0 0
    %93 = vmatpush2.bf16.msra.mxu0 0
    %94 = vmatprep.mubr.bf16.mxu0 0
    %95 = vmatmul.mubr.bf16.gmra.mxu0 %v53
    %v96 = vpop.f32.mrf.mxu0
    %v97 = vadd.f32 %v34, %v96
    %v98 = vpop.f32.mrf.mxu0
    %v99 = vpop.f32.mrf.mxu0
    %v100 = vpop.f32.mrf.mxu0
    %101 = vdwg.mxu0
    %v102 = vmax.f32 %v97, 0.0
    %v103 = vpack.c.bf16 %v102, %v102
    %v104 = vld [vmem:[%s3] sm:$0xf]
    %v105 = vld [vmem:[%s3 + $0x4] sm:$0xf]
    %v106 = vld [vmem:[%s3 + $0x8] sm:$0xf]
    %v107 = vld [vmem:[%s3 + $0xc] sm:$0xf]
    %v108 = vld [vmem:[%s3 + $0x10] sm:$0xf]
    %v109 = vld [vmem:[%s3 + $0x14] sm:$0xf]
    %v110 = vld [vmem:[%s3 + $0x18] sm:$0xf]
    %v111 = vld [vmem:[%s3 + $0x1c] sm:$0xf]
    %v112 = vld [vmem:[%s3 + $0x20] sm:$0xf]
    %v113 = vld [vmem:[%s3 + $0x24] sm:$0xf]
    %v114 = vld [vmem:[%s3 + $0x28] sm:$0xf]
    %v115 = vld [vmem:[%s3 + $0x2c] sm:$0xf]
    %v116 = vld [vmem:[%s3 + $0x30] sm:$0xf]
    %v117 = vld [vmem:[%s3 + $0x34] sm:$0xf]
    %v118 = vld [vmem:[%s3 + $0x38] sm:$0xf]
    %v119 = vld [vmem:[%s3 + $0x3c] sm:$0xf]
    %v120 = vld [vmem:[%s4] sm:$0x1]
    %v122 = vlaneseq
    %v123 = vshrl.u32 %v122, 7
    %v124 = vsub.s32 0, %v123
    %v125 = vrot.slane %v120, %v124
    %v143 = vunpack.c.l.b16 %v104
    %v144 = vunpack.c.l.b16 %v105
    %v145 = vunpack.c.l.b16 %v106
    %v146 = vunpack.c.l.b16 %v107
    %v147 = vunpack.c.l.b16 %v108
    %v148 = vunpack.c.l.b16 %v109
    %v149 = vunpack.c.l.b16 %v110
    %v150 = vunpack.c.l.b16 %v111
    %v151 = vunpack.c.l.b16 %v112
    %v152 = vunpack.c.l.b16 %v113
    %v153 = vunpack.c.l.b16 %v114
    %v154 = vunpack.c.l.b16 %v115
    %v155 = vunpack.c.l.b16 %v116
    %v156 = vunpack.c.l.b16 %v117
    %v157 = vunpack.c.l.b16 %v118
    %v158 = vunpack.c.l.b16 %v119
    %v159 = vpack.c.b16 %v144, %v143
    %v160 = vpack.c.b16 %v146, %v145
    %v161 = vpack.c.b16 %v148, %v147
    %v162 = vpack.c.b16 %v150, %v149
    %v163 = vpack.c.b16 %v152, %v151
    %v164 = vpack.c.b16 %v154, %v153
    %v165 = vpack.c.b16 %v156, %v155
    %v166 = vpack.c.b16 %v158, %v157
    %175 = vmatprep.subr.bf16.mxu0 0
    %176 = vmatpush1.bf16.msra.mxu0 %v166
    %177 = vmatprep.subr.bf16.mxu0 0
    %178 = vmatpush1.bf16.msra.mxu0 %v165
    %179 = vmatprep.subr.bf16.mxu0 0
    %180 = vmatpush1.bf16.msra.mxu0 %v164
    %181 = vmatprep.subr.bf16.mxu0 0
    %182 = vmatpush1.bf16.msra.mxu0 %v163
    %183 = vmatprep.subr.bf16.mxu0 0
    %184 = vmatpush1.bf16.msra.mxu0 %v162
    %185 = vmatprep.subr.bf16.mxu0 0
    %186 = vmatpush1.bf16.msra.mxu0 %v161
    %187 = vmatprep.subr.bf16.mxu0 0
    %188 = vmatpush1.bf16.msra.mxu0 %v160
    %189 = vmatprep.subr.bf16.mxu0 0
    %190 = vmatpush1.bf16.msra.mxu0 %v159
    %191 = vmatprep.subr.bf16.mxu0 0
    %192 = vmatpush2.bf16.msra.mxu0 0
    %193 = vmatprep.subr.bf16.mxu0 0
    %194 = vmatpush2.bf16.msra.mxu0 0
    %195 = vmatprep.subr.bf16.mxu0 0
    %196 = vmatpush2.bf16.msra.mxu0 0
    %197 = vmatprep.subr.bf16.mxu0 0
    %198 = vmatpush2.bf16.msra.mxu0 0
    %199 = vmatprep.subr.bf16.mxu0 0
    %200 = vmatpush2.bf16.msra.mxu0 0
    %201 = vmatprep.subr.bf16.mxu0 0
    %202 = vmatpush2.bf16.msra.mxu0 0
    %203 = vmatprep.subr.bf16.mxu0 0
    %204 = vmatpush2.bf16.msra.mxu0 0
    %205 = vmatprep.subr.bf16.mxu0 0
    %206 = vmatpush2.bf16.msra.mxu0 0
    %207 = vmatprep.mubr.bf16.mxu0 0
    %208 = vmatmul.mubr.bf16.gmra.mxu0 %v103
    %v209 = vpop.f32.mrf.mxu0
    %v210 = vadd.f32 %v125, %v209
    %v211 = vpop.f32.mrf.mxu0
    %v212 = vpop.f32.mrf.mxu0
    %v213 = vpop.f32.mrf.mxu0
    %214 = vdwg.mxu0
    %v215 = vtanh.pop %v210
    %vm216 = vcmask 171008
    %217 = vst.msk [vmem:[#allocation2] sm:$0xff] %vm216, %v215
    // Predicated region
    $region22: #{tpu_custom_call.1} parent=1 // pred_check
      _
    $region23: #{tpu_custom_call.1} parent=1 // pred_check_branch
      %219 = sbr.rel (0) target = $region25
    $region24: #{tpu_custom_call.1} parent=1 // pred_region
      %s221 = ssub.s32 128, 128
      %222 = vsyncadd [#allocation3], %s221
      %s224 = sshll.u32 [#allocation2], 4
      %s225 = int_to_ptr.vmem [resolvable:$true] %s224
      %227 = dma.vmem_to_hbm [thread:$0]  %s225, 128, %s5, [#allocation3]
    $region25: #{tpu_custom_call.1} parent=1 // pred_fallthru
      _
    // Predicated region
    $region26: #{tpu_custom_call.1} parent=1 // pred_check
      _
    $region27: #{tpu_custom_call.1} parent=1 // pred_check_branch
      %229 = sbr.rel (0) target = $region29
    $region28: #{tpu_custom_call.1} parent=1 // pred_region
      %230 = dma.done [#allocation3], 128
    $region29: #{tpu_custom_call.1} parent=1 // pred_fallthru
      _
    %231 = vsyncpa [#allocation3], 1

</llo_original>
